<compile_context>
chip_gen: v7x
topology: tpu7x:2x2x1
jax: 0.10.0
libtpu: 0.0.40
codegen_flags: <defaults>
</compile_context>

<pallas_src>
import functools

import jax
import jax.numpy as jnp
from jax.experimental import pallas as pl
from jax.experimental.pallas import tpu as pltpu

_LANES = 128


def _focal_loss_kernel(x_ref, t_ref, o_ref, acc_ref, *,
                       total_n, blk_rows, needs_mask, alpha, gamma):
    i = pl.program_id(0)

    @pl.when(i == 0)
    def _():
        acc_ref[...] = jnp.zeros_like(acc_ref)

    p = x_ref[...].astype(jnp.float32)
    t = t_ref[...].astype(jnp.float32)

    if needs_mask:
        # Mask lanes past total_n (ragged last row / ragged last block).
        row_ids = jax.lax.broadcasted_iota(jnp.int32, (blk_rows, _LANES), 0)
        lane_ids = jax.lax.broadcasted_iota(jnp.int32, (blk_rows, _LANES), 1)
        flat_idx = (i * blk_rows + row_ids) * _LANES + lane_ids
        valid = flat_idx < total_n
        # p = 1, t = 1 gives per-element BCE of exactly 0 (after the -100
        # clamp: 0 * (-100) == 0), so masked lanes add nothing to the sum.
        p = jnp.where(valid, p, 1.0)
        t = jnp.where(valid, t, 1.0)

    # Per-element binary cross entropy with PyTorch's log clamp at -100.
    log_p = jnp.maximum(jnp.log(p), -100.0)
    log_1mp = jnp.maximum(jnp.log(1.0 - p), -100.0)
    bce = -(t * log_p + (1.0 - t) * log_1mp)

    # Vector accumulator: plain VPU add per step; single XLU reduce at the end.
    acc_ref[...] += bce

    @pl.when(i == pl.num_programs(0) - 1)
    def _():
        mean_bce = jnp.sum(acc_ref[...]) / jnp.float32(total_n)  # reduction='mean'
        pt = jnp.exp(-mean_bce)
        one_m_pt = 1.0 - pt
        if gamma == 2.0:                       # trace-time constant: avoid pow lowering
            mod = one_m_pt * one_m_pt
        else:
            mod = one_m_pt ** jnp.float32(gamma)
        o_ref[0, 0] = jnp.float32(alpha) * mod * mean_bce


def focal_loss(inputs, targets, *, alpha=1.0, gamma=2.0, max_block_rows=2048):
    """Pallas TPU implementation of FocalLoss.forward (logits=False, reduce=True)."""
    assert inputs.shape == targets.shape
    assert max_block_rows % 8 == 0
    total_n = int(inputs.size)

    # Keep native dtype; upcast happens inside the kernel.
    x = inputs.reshape(-1)
    t = targets.reshape(-1)

    # Pad only to a whole number of 128-lane rows (and only when needed);
    # padded lanes are masked inside the kernel so the pad value is irrelevant.
    padded = pl.cdiv(total_n, _LANES) * _LANES
    if padded != total_n:
        x = jnp.pad(x, (0, padded - total_n))
        t = jnp.pad(t, (0, padded - total_n))

    rows = padded // _LANES
    x2 = x.reshape(rows, _LANES)
    t2 = t.reshape(rows, _LANES)

    if rows <= max_block_rows:
        blk_rows = rows                    # single block: full first dim allowed
    else:
        blk_rows = max_block_rows          # multiple of 8 -> valid sub-block
    num_blocks = pl.cdiv(rows, blk_rows)
    needs_mask = (padded != total_n) or (rows % blk_rows != 0)

    kernel = functools.partial(
        _focal_loss_kernel,
        total_n=total_n, blk_rows=blk_rows, needs_mask=needs_mask,
        alpha=float(alpha), gamma=float(gamma))

    out = pl.pallas_call(
        kernel,
        out_shape=jax.ShapeDtypeStruct((1, 1), jnp.float32),
        grid_spec=pltpu.PrefetchScalarGridSpec(
            num_scalar_prefetch=0,
            grid=(num_blocks,),
            in_specs=[
                pl.BlockSpec((blk_rows, _LANES), lambda i: (i, 0)),
                pl.BlockSpec((blk_rows, _LANES), lambda i: (i, 0)),
            ],
            out_specs=pl.BlockSpec(memory_space=pltpu.SMEM),
            scratch_shapes=[pltpu.VMEM((blk_rows, _LANES), jnp.float32)],
        ),
        compiler_params=pltpu.CompilerParams(
            dimension_semantics=("arbitrary",),   # carried accumulator -> reduction axis
        ),
    )(x2, t2)

    return out[0, 0]


def _focal_loss_ref(inputs, targets, *, alpha=1.0, gamma=2.0):
    p = inputs.astype(jnp.float32)
    t = targets.astype(jnp.float32)
    log_p = jnp.maximum(jnp.log(p), -100.0)
    log_1mp = jnp.maximum(jnp.log(1.0 - p), -100.0)
    bce = jnp.mean(-(t * log_p + (1.0 - t) * log_1mp))
    pt = jnp.exp(-bce)
    return alpha * (1.0 - pt) ** gamma * bce


if __name__ == "__main__":
    key = jax.random.PRNGKey(0)
    k1, k2 = jax.random.split(key)

    # Small NCHW-like shape; inputs are probabilities (logits=False).
    shape = (2, 4, 16, 16)
    inputs = jax.nn.sigmoid(jax.random.normal(k1, shape, dtype=jnp.float32))
    targets = (jax.random.uniform(k2, shape) > 0.5).astype(jnp.float32)

    ref = _focal_loss_ref(inputs, targets)

    # Default path (single large block).
    loss = jax.block_until_ready(focal_loss(inputs, targets))
    assert jnp.allclose(loss, ref, rtol=1e-5, atol=1e-6), (loss, ref)

    # Multi-block accumulation path (small max_block_rows forces 2 grid steps).
    loss_mb = jax.block_until_ready(focal_loss(inputs, targets, max_block_rows=8))
    assert jnp.allclose(loss_mb, ref, rtol=1e-5, atol=1e-6), (loss_mb, ref)

    # Ragged / non-128-divisible shape exercising the in-kernel mask.
    k3, k4 = jax.random.split(k2)
    shape2 = (2, 3, 7, 11)
    inputs2 = jax.nn.sigmoid(jax.random.normal(k3, shape2, dtype=jnp.float32))
    targets2 = (jax.random.uniform(k4, shape2) > 0.5).astype(jnp.float32)
    loss2 = jax.block_until_ready(focal_loss(inputs2, targets2))
    ref2 = _focal_loss_ref(inputs2, targets2)
    assert jnp.allclose(loss2, ref2, rtol=1e-5, atol=1e-6), (loss2, ref2)

    print("KERNEL_OK")
</pallas_src>

<mosaic_0001>
module attributes {stable_mosaic.version = 11 : i64} {
  func.func @_focal_loss_kernel(%arg0: i32, %arg1: memref<16x128xf32, #tpu.memory_space<vmem>>, %arg2: memref<16x128xf32, #tpu.memory_space<vmem>>, %arg3: memref<1x1xf32, #tpu.memory_space<smem>>, %arg4: memref<16x128xf32, #tpu.memory_space<vmem>>) attributes {dimension_semantics = [#tpu.dimension_semantics<arbitrary>], iteration_bounds = array<i64: 1>, scalar_prefetch = 0 : i64, scratch_operands = 1 : i64, tpu.core_type = #tpu.core_type<tc>, window_params = [{transform_indices = @transform_0, window_bounds = array<i64: 16, 128>}, {transform_indices = @transform_1, window_bounds = array<i64: 16, 128>}, {transform_indices = @transform_2, window_bounds = array<i64: 1, 1>}]} {
    %c0_i32 = arith.constant 0 : i32
    %0 = arith.cmpi eq, %arg0, %c0_i32 : i32
    %1 = arith.extui %0 : i1 to i32
    %c0_i32_0 = arith.constant 0 : i32
    %2 = arith.cmpi ne, %1, %c0_i32_0 : i32
    scf.if %2 {
      %cst_14 = arith.constant 0.000000e+00 : f32
      %26 = vector.broadcast %cst_14 : f32 to vector<16x128xf32>
      %c0_15 = arith.constant 0 : index
      %c0_16 = arith.constant 0 : index
      %27 = vector.load %arg4[%c0_15, %c0_16] : memref<16x128xf32, #tpu.memory_space<vmem>>, vector<16x128xf32>
      tpu.vector_store %arg4[%c0_15, %c0_16], %26 {strides = array<i32>} : memref<16x128xf32, #tpu.memory_space<vmem>>, vector<16x128xf32>,
    } else {
    }
    %c0 = arith.constant 0 : index
    %c0_1 = arith.constant 0 : index
    %3 = vector.load %arg1[%c0, %c0_1] : memref<16x128xf32, #tpu.memory_space<vmem>>, vector<16x128xf32>
    %c0_2 = arith.constant 0 : index
    %c0_3 = arith.constant 0 : index
    %4 = vector.load %arg2[%c0_2, %c0_3] : memref<16x128xf32, #tpu.memory_space<vmem>>, vector<16x128xf32>
    %5 = math.log %3 : vector<16x128xf32>
    %cst = arith.constant -1.000000e+02 : f32
    %6 = vector.broadcast %cst : f32 to vector<16x128xf32>
    %7 = arith.maximumf %5, %6 : vector<16x128xf32>
    %cst_4 = arith.constant 1.000000e+00 : f32
    %8 = vector.broadcast %cst_4 : f32 to vector<16x128xf32>
    %9 = arith.subf %8, %3 : vector<16x128xf32>
    %10 = math.log %9 : vector<16x128xf32>
    %cst_5 = arith.constant -1.000000e+02 : f32
    %11 = vector.broadcast %cst_5 : f32 to vector<16x128xf32>
    %12 = arith.maximumf %10, %11 : vector<16x128xf32>
    %13 = arith.mulf %4, %7 : vector<16x128xf32>
    %cst_6 = arith.constant 1.000000e+00 : f32
    %14 = vector.broadcast %cst_6 : f32 to vector<16x128xf32>
    %15 = arith.subf %14, %4 : vector<16x128xf32>
    %16 = arith.mulf %15, %12 : vector<16x128xf32>
    %17 = arith.addf %13, %16 : vector<16x128xf32>
    %cst_7 = arith.constant 0.000000e+00 : f32
    %18 = vector.broadcast %cst_7 : f32 to vector<16x128xf32>
    %19 = arith.subf %18, %17 : vector<16x128xf32>
    %c0_8 = arith.constant 0 : index
    %c0_9 = arith.constant 0 : index
    %20 = vector.load %arg4[%c0_8, %c0_9] : memref<16x128xf32, #tpu.memory_space<vmem>>, vector<16x128xf32>
    %21 = arith.addf %20, %19 : vector<16x128xf32>
    %c0_10 = arith.constant 0 : index
    %c0_11 = arith.constant 0 : index
    %22 = vector.load %arg4[%c0_10, %c0_11] : memref<16x128xf32, #tpu.memory_space<vmem>>, vector<16x128xf32>
    tpu.vector_store %arg4[%c0_10, %c0_11], %21 {strides = array<i32>} : memref<16x128xf32, #tpu.memory_space<vmem>>, vector<16x128xf32>,
    %c0_i32_12 = arith.constant 0 : i32
    %23 = arith.cmpi eq, %arg0, %c0_i32_12 : i32
    %24 = arith.extui %23 : i1 to i32
    %c0_i32_13 = arith.constant 0 : i32
    %25 = arith.cmpi ne, %24, %c0_i32_13 : i32
    scf.if %25 {
      %c0_14 = arith.constant 0 : index
      %c0_15 = arith.constant 0 : index
      %26 = vector.load %arg4[%c0_14, %c0_15] : memref<16x128xf32, #tpu.memory_space<vmem>>, vector<16x128xf32>
      %27 = vector.shape_cast %26 : vector<16x128xf32> to vector<1x16x128xf32>
      %cst_16 = arith.constant dense<0.000000e+00> : vector<1xf32>
      %28 = vector.multi_reduction <add>, %27, %cst_16 [1, 2] : vector<1x16x128xf32> to vector<1xf32>
      %29 = vector.shape_cast %28 : vector<1xf32> to vector<1x1x1xf32>
      %30 = vector.extract %29[0, 0, 0] : f32 from vector<1x1x1xf32>
      %cst_17 = arith.constant 2.048000e+03 : f32
      %31 = arith.divf %30, %cst_17 : f32
      %cst_18 = arith.constant 0.000000e+00 : f32
      %32 = arith.subf %cst_18, %31 : f32
      %33 = math.exp %32 : f32
      %cst_19 = arith.constant 1.000000e+00 : f32
      %34 = arith.subf %cst_19, %33 : f32
      %35 = arith.mulf %34, %34 : f32
      %cst_20 = arith.constant 1.000000e+00 : f32
      %36 = arith.mulf %cst_20, %35 : f32
      %37 = arith.mulf %36, %31 : f32
      %c0_21 = arith.constant 0 : index
      %c0_22 = arith.constant 0 : index
      %38 = memref.load %arg3[%c0_21, %c0_22] : memref<1x1xf32, #tpu.memory_space<smem>>
      memref.store %37, %arg3[%c0_21, %c0_22] : memref<1x1xf32, #tpu.memory_space<smem>>
    } else {
    }
    return
  }
  func.func @transform_0(%arg0: i32) -> (i32, i32) {
    %c0_i32 = arith.constant 0 : i32
    %c0_i32_0 = arith.constant 0 : i32
    return %arg0, %c0_i32 : i32, i32
  }
  func.func @transform_1(%arg0: i32) -> (i32, i32) {
    %c0_i32 = arith.constant 0 : i32
    %c0_i32_0 = arith.constant 0 : i32
    return %arg0, %c0_i32 : i32, i32
  }
  func.func @transform_2(%arg0: i32) -> (i32, i32) {
    %c0_i32 = arith.constant 0 : i32
    %c0_i32_0 = arith.constant 0 : i32
    %c0_i32_1 = arith.constant 0 : i32
    return %c0_i32, %c0_i32_0 : i32, i32
  }
}

</mosaic_0001>

<llo_original>
// kernel: tpu_custom_call.1
$region0: #{tpu_custom_call.1}
  #allocation0 [shape = 'u32[]', space=smem, size = 0x4, offset = 0x4, fixed_abs, tag = 'smem constant byte address 0x4 - core index']
  #allocation1 [shape = 'u32[144,128]{1,0:T(1,128)}', space=vmem, size = 0x12000, scoped, tag = 'internal scratch']
  #allocation2 [shape = 'f32[16,128]{1,0:T(8,128)}', space=vmem, size = 0x2000, scoped, tag = 'scratch operand']
  %s0 = inlined_call_operand.hbm [shape: f32[16,128], index: 0, kind: input, shape index: {}]
  %s1 = inlined_call_operand.hbm [shape: f32[16,128], index: 1, kind: input, shape index: {}]
  %s2 = inlined_call_operand.hbm [shape: f32[1,1], index: 2, kind: output, shape index: {}]
  %s3 = sld [smem:[#allocation0]]
  $region34: #{tpu_custom_call.1} parent=0
    _
  %s5 = ssub.s32 1, %s3
  %s6 = scalar_select 0, %s5, %s3
  $region1: #{tpu_custom_call.1} parent=0
    #allocation3 [shape = 'u8[8192]{0}', space=vmem, size = 0x2000, scoped, tag = 'input window, operand 0, single buffered']
    #allocation4 [shape = 's32[1]{0}', space=sflag, size = 0x4, scoped, tag = 'scoped memory for tpu_custom_call.1']
    #allocation5 [shape = 's32[1]{0}', space=sflag, size = 0x4, scoped, tag = 'scoped memory for tpu_custom_call.1']
    #allocation6 [shape = 'u8[8192]{0}', space=vmem, size = 0x2000, scoped, tag = 'input window, operand 1, single buffered']
    #allocation7 [shape = 's32[1]{0}', space=sflag, size = 0x4, scoped, tag = 'scoped memory for tpu_custom_call.1']
    #allocation8 [shape = 'u8[512]{0}', space=smem, size = 0x200, scoped, tag = 'output window, operand 0, single buffered']
    %7 = vsyncpa [#allocation4], 0
    %8 = vsyncpa [#allocation7], 0
    %9 = vsyncpa [#allocation5], 0
    // Predicated region
    $region2: #{tpu_custom_call.1} parent=1 // pred_check
      _
    $region3: #{tpu_custom_call.1} parent=1 // pred_check_branch
      %11 = sbr.rel (0) target = $region5
    $region4: #{tpu_custom_call.1} parent=1 // pred_region
      %s13 = ssub.s32 256, 256
      %14 = vsyncadd [#allocation4], %s13
      %s15 = sshll.u32 [#allocation3], 4
      %s16 = int_to_ptr.vmem [resolvable:$true] %s15
      %21 = dma.hbm_to_vmem [thread:$0]  %s0, 256, %s16, [#allocation4], 128, 128, 8
    $region5: #{tpu_custom_call.1} parent=1 // pred_fallthru
      _
    // Predicated region
    $region6: #{tpu_custom_call.1} parent=1 // pred_check
      _
    $region7: #{tpu_custom_call.1} parent=1 // pred_check_branch
      %23 = sbr.rel (0) target = $region9
    $region8: #{tpu_custom_call.1} parent=1 // pred_region
      %s25 = ssub.s32 256, 256
      %26 = vsyncadd [#allocation7], %s25
      %s27 = sshll.u32 [#allocation6], 4
      %s28 = int_to_ptr.vmem [resolvable:$true] %s27
      %33 = dma.hbm_to_vmem [thread:$0]  %s1, 256, %s28, [#allocation7], 128, 128, 8
    $region9: #{tpu_custom_call.1} parent=1 // pred_fallthru
      _
    // Predicated region
    $region10: #{tpu_custom_call.1} parent=1 // pred_check
      _
    $region11: #{tpu_custom_call.1} parent=1 // pred_check_branch
      %35 = sbr.rel (0) target = $region13
    $region12: #{tpu_custom_call.1} parent=1 // pred_region
      %36 = dma.done [#allocation4], 256
    $region13: #{tpu_custom_call.1} parent=1 // pred_fallthru
      _
    // Predicated region
    $region14: #{tpu_custom_call.1} parent=1 // pred_check
      _
    $region15: #{tpu_custom_call.1} parent=1 // pred_check_branch
      %38 = sbr.rel (0) target = $region17
    $region16: #{tpu_custom_call.1} parent=1 // pred_region
      %39 = dma.done [#allocation7], 256
    $region17: #{tpu_custom_call.1} parent=1 // pred_fallthru
      _
    %p40 = scmp.eq.s32.totalorder 0, 0
    // Predicated region
    $region18: #{tpu_custom_call.1} parent=1 // pred_check
      %p41 = pneg %p40
    $region19: #{tpu_custom_call.1} parent=1 // pred_check_branch
      %43 = sbr.rel (%p41) target = $region21
    $region20: #{tpu_custom_call.1} parent=1 // pred_region
      %44 = vst [vmem:[#allocation2] sm:$0xff] 0.0
      %45 = vst [vmem:[#allocation2 + $0x8] sm:$0xff] 0.0
    $region21: #{tpu_custom_call.1} parent=1 // pred_fallthru
      _
    %v46 = vld [vmem:[#allocation3] sm:$0xff]
    %v47 = vld [vmem:[#allocation3 + $0x8] sm:$0xff]
    %v48 = vld [vmem:[#allocation6] sm:$0xff]
    %v49 = vld [vmem:[#allocation6 + $0x8] sm:$0xff]
    %v50 = vlog2.pop %v46
    %v51 = vmul.f32 %v50, 0.6931472
    %v52 = vlog2.pop %v47
    %v53 = vmul.f32 %v52, 0.6931472
    %v54 = vmax.f32 %v51, -100.0
    %v55 = vmax.f32 %v53, -100.0
    %v56 = vsub.f32 1.0, %v46
    %v57 = vsub.f32 1.0, %v47
    %v58 = vlog2.pop %v56
    %v59 = vmul.f32 %v58, 0.6931472
    %v60 = vlog2.pop %v57
    %v61 = vmul.f32 %v60, 0.6931472
    %v62 = vmax.f32 %v59, -100.0
    %v63 = vmax.f32 %v61, -100.0
    %v64 = vmul.f32 %v48, %v54
    %v65 = vmul.f32 %v49, %v55
    %v66 = vsub.f32 1.0, %v48
    %v67 = vsub.f32 1.0, %v49
    %v68 = vmul.f32 %v66, %v62
    %v69 = vmul.f32 %v67, %v63
    %v70 = vadd.f32 %v64, %v68
    %v71 = vadd.f32 %v65, %v69
    %v72 = vsub.f32 0.0, %v70
    %v73 = vsub.f32 0.0, %v71
    %v74 = vld [vmem:[#allocation2] sm:$0xff]
    %v75 = vld [vmem:[#allocation2 + $0x8] sm:$0xff]
    %v76 = vadd.f32 %v74, %v72
    %v77 = vadd.f32 %v75, %v73
    %78 = vst [vmem:[#allocation2] sm:$0xff] %v76
    %79 = vst [vmem:[#allocation2 + $0x8] sm:$0xff] %v77
    // Predicated region
    $region22: #{tpu_custom_call.1} parent=1 // pred_check
      %p80 = pneg %p40
    $region23: #{tpu_custom_call.1} parent=1 // pred_check_branch
      %82 = sbr.rel (%p80) target = $region25
    $region24: #{tpu_custom_call.1} parent=1 // pred_region
      %v83 = vld [vmem:[#allocation2] sm:$0xff]
      %v84 = vld [vmem:[#allocation2 + $0x8] sm:$0xff]
      %v85 = vadd.f32 %v83, %v84
      %86 = vadd.xlane.f32.xlu0 %v85
      %v87 = vpop.xlane.xlu0 %86
      %v88 = vrot.slane %v87, 4
      %v89 = vadd.f32 %v87, %v88
      %v90 = vrot.slane %v89, 2
      %v91 = vadd.f32 %v89, %v90
      %v92 = vrot.slane %v91, 1
      %v93 = vadd.f32 %v91, %v92
      %s94 = vtos %v93
      %v95 = vrcp.pop 2048.0
      %s96 = vtos %v95
      %s97 = smul.f32 %s94, %s96
      %s98 = ssub.f32 0.0, %s97
      %v99 = vstv %s98
      %v100 = vmul.f32 %v99, 1.442695
      %v101 = vpow.pop %v100
      %s102 = vtos %v101
      %s103 = ssub.f32 1.0, %s102
      %s104 = smul.f32 %s103, %s103
      %s105 = smul.f32 %s104, %s97
      %s106 = scalar_lea.smem [#allocation8], 0
      %107 = sst [smem:[%s106]] %s105
    $region25: #{tpu_custom_call.1} parent=1 // pred_fallthru
      _
    // Predicated region
    $region26: #{tpu_custom_call.1} parent=1 // pred_check
      _
    $region27: #{tpu_custom_call.1} parent=1 // pred_check_branch
      %109 = sbr.rel (0) target = $region29
    $region28: #{tpu_custom_call.1} parent=1 // pred_region
      %s111 = ssub.s32 16, 16
      %112 = vsyncadd [#allocation5], %s111
      %115 = dma.smem_to_hbm [#allocation8], 16, %s2, [#allocation5]
    $region29: #{tpu_custom_call.1} parent=1 // pred_fallthru
      _
    // Predicated region
    $region30: #{tpu_custom_call.1} parent=1 // pred_check
      _
    $region31: #{tpu_custom_call.1} parent=1 // pred_check_branch
      %117 = sbr.rel (0) target = $region33
    $region32: #{tpu_custom_call.1} parent=1 // pred_region
      %118 = dma.done [#allocation5], 16
    $region33: #{tpu_custom_call.1} parent=1 // pred_fallthru
      _
    %119 = sfence
    %120 = vsyncpa [#allocation4], 1
    %121 = vsyncpa [#allocation7], 1
    %122 = vsyncpa [#allocation5], 1

</llo_original>
